<compile_context>
chip_gen: v6e
topology: v6e:2x2x1
jax: 0.10.0
libtpu: 0.0.40
codegen_flags: <defaults>
</compile_context>

<pallas_src>
import jax
import jax.numpy as jnp
from jax.experimental import pallas as pl
from jax.experimental.pallas import tpu as pltpu

LANE = 128


def _round_up(v, m):
    return (v + m - 1) // m * m


def gcn_layer_kernel(a_ref, f_ref, w_ref, b_ref, o_ref, acc_ref):
    """One GCN layer row-tile: out = ((A_hat @ F) @ W) + b.

    Grid = (row tiles of A_hat, reduction tiles over A_hat columns).
    (A_hat @ F) partial sums accumulate in f32 VMEM scratch; the small dense
    weight matmul + bias run once on the last reduction step.
    """
    k = pl.program_id(1)

    @pl.when(k == 0)
    def _():
        acc_ref[...] = jnp.zeros_like(acc_ref)

    # Contract A_hat against the narrow (lane-padded) feature dim.
    acc_ref[...] += jnp.dot(a_ref[...], f_ref[...],
                            preferred_element_type=jnp.float32)

    @pl.when(k == pl.num_programs(1) - 1)
    def _():
        o_ref[...] = (
            jnp.dot(acc_ref[...], w_ref[...],
                    preferred_element_type=jnp.float32) + b_ref[...]
        ).astype(o_ref.dtype)


def _gcn_layer(a_hat, feats, w, b, *, tile, out_dtype):
    """a_hat: [Np, Np] bf16, feats: [Np, Cf] bf16, w: [Cf, Co] f32, b: [1, Co] f32."""
    n_pad = a_hat.shape[0]
    cf = feats.shape[1]
    co = w.shape[1]
    grid = (n_pad // tile, n_pad // tile)
    return pl.pallas_call(
        gcn_layer_kernel,
        out_shape=jax.ShapeDtypeStruct((n_pad, co), out_dtype),
        grid_spec=pltpu.PrefetchScalarGridSpec(
            num_scalar_prefetch=0,
            grid=grid,
            in_specs=[
                pl.BlockSpec((tile, tile), lambda i, k: (i, k)),  # A_hat tile
                pl.BlockSpec((tile, cf), lambda i, k: (k, 0)),    # features tile
                pl.BlockSpec((cf, co), lambda i, k: (0, 0)),      # W (resident)
                pl.BlockSpec((1, co), lambda i, k: (0, 0)),       # bias (resident)
            ],
            out_specs=pl.BlockSpec((tile, co), lambda i, k: (i, 0)),
            scratch_shapes=[pltpu.VMEM((tile, cf), jnp.float32)],
        ),
        compiler_params=pltpu.CompilerParams(
            dimension_semantics=("parallel", "arbitrary")),
    )(a_hat, feats, w, b)


def _build_a_hat(edge_index, n):
    """Dense symmetric-normalized adjacency, matching PyG gcn_norm semantics."""
    src, dst = edge_index[0], edge_index[1]
    off_diag = (src != dst).astype(jnp.float32)
    # scatter-ADD duplicate edges; drop existing self-loops, re-add diag with 1
    # (add_remaining_self_loops with fill_value=1).
    adj = jnp.zeros((n, n), jnp.float32).at[dst, src].add(off_diag)
    adj = adj + jnp.eye(n, dtype=jnp.float32)
    deg = adj.sum(axis=1)
    dinv = jnp.where(deg > 0.0, jax.lax.rsqrt(deg), 0.0)
    return dinv[:, None] * adj * dinv[None, :]


def _pad2(x, rows, cols, dtype=None):
    out = jnp.pad(x, ((0, rows - x.shape[0]), (0, cols - x.shape[1])))
    return out.astype(dtype) if dtype is not None else out


def _pick_tile(n):
    n_pad = _round_up(max(n, 1), LANE)
    for t in (512, 256, 128):
        if n_pad % t == 0:
            return n_pad, t
    return n_pad, LANE


@jax.jit
def gcn_2layer(x, edge_index, w1, b1, w2, b2):
    """x: [N, C_in] f32, edge_index: [2, E] int32 (row 0 = src, row 1 = dst)."""
    n, c_in = x.shape
    hidden = w1.shape[1]
    c_out = w2.shape[1]

    a_hat = _build_a_hat(edge_index, n)

    n_pad, tile = _pick_tile(n)
    cin_p = _round_up(c_in, LANE)
    hid_p = _round_up(hidden, LANE)
    out_p = _round_up(c_out, LANE)

    # bf16 for the big streamed operands (A_hat, features); f32 weights/bias.
    a_p = _pad2(a_hat, n_pad, n_pad, jnp.bfloat16)
    x_p = _pad2(x, n_pad, cin_p, jnp.bfloat16)
    w1_p = _pad2(w1, cin_p, hid_p)
    b1_p = _pad2(b1.reshape(1, -1), 1, hid_p)
    w2_p = _pad2(w2, hid_p, out_p)
    b2_p = _pad2(b2.reshape(1, -1), 1, out_p)

    # layer 1: h = (A_hat @ X) @ W1 + b1
    h = _gcn_layer(a_p, x_p, w1_p, b1_p, tile=tile, out_dtype=jnp.bfloat16)
    # dropout(p=0, training=False) -> identity
    # TODO(synk): nonzero training-mode dropout would need pltpu.prng_random_bits
    #             masking between the two passes.
    # layer 2: z = (A_hat @ H) @ W2 + b2
    z = _gcn_layer(a_p, h, w2_p, b2_p, tile=tile, out_dtype=jnp.float32)

    return z[:n, :c_out]


def gcn_2layer_ref(x, edge_index, w1, b1, w2, b2):
    """Pure-JAX f32 reference for correctness checking."""
    a_hat = _build_a_hat(edge_index, x.shape[0])
    h = a_hat @ (x @ w1) + b1
    return a_hat @ (h @ w2) + b2


if __name__ == "__main__":
    # Small deterministic problem: N=16 nodes, in=4, hidden=32, out=8, E=32 edges.
    # (Validation size only — benchmark at N >= 1024 with xprof, not here.)
    key = jax.random.PRNGKey(0)
    k_x, k_e, k_w1, k_w2 = jax.random.split(key, 4)

    num_nodes, in_channels, hidden_channels, out_channels, num_edges = 16, 4, 32, 8, 32

    x = jax.random.normal(k_x, (num_nodes, in_channels), dtype=jnp.float32)
    edge_index = jax.random.randint(k_e, (2, num_edges), 0, num_nodes, dtype=jnp.int32)

    # Deterministic glorot-style init (GCNConv: weight [C_in, C_out], bias zeros).
    def glorot(k, fan_in, fan_out):
        limit = (6.0 / (fan_in + fan_out)) ** 0.5
        return jax.random.uniform(k, (fan_in, fan_out), jnp.float32, -limit, limit)

    w1 = glorot(k_w1, in_channels, hidden_channels)
    b1 = jnp.zeros((hidden_channels,), dtype=jnp.float32)
    w2 = glorot(k_w2, hidden_channels, out_channels)
    b2 = jnp.zeros((out_channels,), dtype=jnp.float32)

    out = gcn_2layer(x, edge_index, w1, b1, w2, b2)
    out = jax.block_until_ready(out)

    ref = gcn_2layer_ref(x, edge_index, w1, b1, w2, b2)
    assert out.shape == (num_nodes, out_channels)
    # bf16 streamed operands with f32 accumulation -> loose-ish tolerance vs f32 ref.
    assert jnp.allclose(out, ref, atol=3e-2, rtol=3e-2), float(jnp.max(jnp.abs(out - ref)))

    print("KERNEL_OK")
</pallas_src>

<mosaic_0001>
module attributes {stable_mosaic.version = 11 : i64} {
  func.func private @main(%arg0: i32) attributes {dimension_semantics = [#tpu.dimension_semantics<core_parallel>], iteration_bounds = array<i64: 2>, tpu.core_type = #tpu.core_type<sc_scalar_subcore>, window_params = []} {
    return
  }
}

module attributes {stable_mosaic.version = 11 : i64} {
  func.func private @main(%arg0: i32) attributes {dimension_semantics = [#tpu.dimension_semantics<core_parallel>], iteration_bounds = array<i64: 2>, tpu.core_type = #tpu.core_type<sc_scalar_subcore>, window_params = []} {
    return
  }
}

module attributes {stable_mosaic.version = 11 : i64} {
  func.func @gcn_layer_kernel(%arg0: i32, %arg1: i32, %arg2: memref<128x128xbf16, #tpu.memory_space<vmem>>, %arg3: memref<128x128xbf16, #tpu.memory_space<vmem>>, %arg4: memref<128x128xf32, #tpu.memory_space<vmem>>, %arg5: memref<1x128xf32, #tpu.memory_space<vmem>>, %arg6: memref<128x128xf32, #tpu.memory_space<vmem>>, %arg7: memref<128x128xf32, #tpu.memory_space<vmem>>) attributes {dimension_semantics = [#tpu.dimension_semantics<parallel>, #tpu.dimension_semantics<arbitrary>], iteration_bounds = array<i64: 1, 1>, scalar_prefetch = 0 : i64, scratch_operands = 1 : i64, tpu.core_type = #tpu.core_type<tc>, window_params = [{transform_indices = @transform_0, window_bounds = array<i64: 128, 128>}, {transform_indices = @transform_1, window_bounds = array<i64: 128, 128>}, {pipeline_mode = #tpu.pipeline_mode<synchronous>, transform_indices = @transform_2, window_bounds = array<i64: 128, 128>}, {pipeline_mode = #tpu.pipeline_mode<synchronous>, transform_indices = @transform_3, window_bounds = array<i64: 1, 128>}, {transform_indices = @transform_4, window_bounds = array<i64: 128, 128>}]} {
    %c0_i32 = arith.constant 0 : i32
    %0 = arith.cmpi eq, %arg1, %c0_i32 : i32
    %1 = arith.extui %0 : i1 to i32
    %c0_i32_0 = arith.constant 0 : i32
    %2 = arith.cmpi ne, %1, %c0_i32_0 : i32
    scf.if %2 {
      %cst_10 = arith.constant 0.000000e+00 : f32
      %12 = vector.broadcast %cst_10 : f32 to vector<128x128xf32>
      %c0_11 = arith.constant 0 : index
      %c0_12 = arith.constant 0 : index
      %13 = vector.load %arg7[%c0_11, %c0_12] : memref<128x128xf32, #tpu.memory_space<vmem>>, vector<128x128xf32>
      tpu.vector_store %arg7[%c0_11, %c0_12], %12 {strides = array<i32>} : memref<128x128xf32, #tpu.memory_space<vmem>>, vector<128x128xf32>,
    } else {
    }
    %c0 = arith.constant 0 : index
    %c0_1 = arith.constant 0 : index
    %3 = vector.load %arg7[%c0, %c0_1] : memref<128x128xf32, #tpu.memory_space<vmem>>, vector<128x128xf32>
    %c0_2 = arith.constant 0 : index
    %c0_3 = arith.constant 0 : index
    %4 = vector.load %arg2[%c0_2, %c0_3] : memref<128x128xbf16, #tpu.memory_space<vmem>>, vector<128x128xbf16>
    %c0_4 = arith.constant 0 : index
    %c0_5 = arith.constant 0 : index
    %5 = vector.load %arg3[%c0_4, %c0_5] : memref<128x128xbf16, #tpu.memory_space<vmem>>, vector<128x128xbf16>
    %cst = arith.constant dense<0.000000e+00> : vector<128x128xf32>
    %6 = tpu.matmul %4, %5, %cst {dimension_numbers = #tpu.dot_dimension_numbers<[1], [0], [0], [1], [0, 0, 1, 1], [], []>} : vector<128x128xbf16>, vector<128x128xbf16>, vector<128x128xf32> -> vector<128x128xf32>
    %7 = arith.addf %3, %6 : vector<128x128xf32>
    %c0_6 = arith.constant 0 : index
    %c0_7 = arith.constant 0 : index
    %8 = vector.load %arg7[%c0_6, %c0_7] : memref<128x128xf32, #tpu.memory_space<vmem>>, vector<128x128xf32>
    tpu.vector_store %arg7[%c0_6, %c0_7], %7 {strides = array<i32>} : memref<128x128xf32, #tpu.memory_space<vmem>>, vector<128x128xf32>,
    %c0_i32_8 = arith.constant 0 : i32
    %9 = arith.cmpi eq, %arg1, %c0_i32_8 : i32
    %10 = arith.extui %9 : i1 to i32
    %c0_i32_9 = arith.constant 0 : i32
    %11 = arith.cmpi ne, %10, %c0_i32_9 : i32
    scf.if %11 {
      %c0_10 = arith.constant 0 : index
      %c0_11 = arith.constant 0 : index
      %12 = vector.load %arg7[%c0_10, %c0_11] : memref<128x128xf32, #tpu.memory_space<vmem>>, vector<128x128xf32>
      %c0_12 = arith.constant 0 : index
      %c0_13 = arith.constant 0 : index
      %13 = vector.load %arg4[%c0_12, %c0_13] : memref<128x128xf32, #tpu.memory_space<vmem>>, vector<128x128xf32>
      %cst_14 = arith.constant dense<0.000000e+00> : vector<128x128xf32>
      %14 = tpu.matmul %12, %13, %cst_14 {dimension_numbers = #tpu.dot_dimension_numbers<[1], [0], [0], [1], [0, 0, 1, 1], [], []>} : vector<128x128xf32>, vector<128x128xf32>, vector<128x128xf32> -> vector<128x128xf32>
      %c0_15 = arith.constant 0 : index
      %c0_16 = arith.constant 0 : index
      %15 = vector.load %arg5[%c0_15, %c0_16] : memref<1x128xf32, #tpu.memory_space<vmem>>, vector<1x128xf32>
      %16 = vector.broadcast %15 : vector<1x128xf32> to vector<128x128xf32>
      %17 = arith.addf %14, %16 : vector<128x128xf32>
      %c0_17 = arith.constant 0 : index
      %c0_18 = arith.constant 0 : index
      %18 = vector.load %arg6[%c0_17, %c0_18] : memref<128x128xf32, #tpu.memory_space<vmem>>, vector<128x128xf32>
      tpu.vector_store %arg6[%c0_17, %c0_18], %17 {strides = array<i32>} : memref<128x128xf32, #tpu.memory_space<vmem>>, vector<128x128xf32>,
    } else {
    }
    return
  }
  func.func @transform_0(%arg0: i32, %arg1: i32) -> (i32, i32) {
    %c0_i32 = arith.constant 0 : i32
    return %arg0, %arg1 : i32, i32
  }
  func.func @transform_1(%arg0: i32, %arg1: i32) -> (i32, i32) {
    %c0_i32 = arith.constant 0 : i32
    %c0_i32_0 = arith.constant 0 : i32
    return %arg1, %c0_i32 : i32, i32
  }
  func.func @transform_2(%arg0: i32, %arg1: i32) -> (i32, i32) {
    %c0_i32 = arith.constant 0 : i32
    %c0_i32_0 = arith.constant 0 : i32
    %c0_i32_1 = arith.constant 0 : i32
    return %c0_i32, %c0_i32_0 : i32, i32
  }
  func.func @transform_3(%arg0: i32, %arg1: i32) -> (i32, i32) {
    %c0_i32 = arith.constant 0 : i32
    %c0_i32_0 = arith.constant 0 : i32
    %c0_i32_1 = arith.constant 0 : i32
    return %c0_i32, %c0_i32_0 : i32, i32
  }
  func.func @transform_4(%arg0: i32, %arg1: i32) -> (i32, i32) {
    %c0_i32 = arith.constant 0 : i32
    %c0_i32_0 = arith.constant 0 : i32
    return %arg0, %c0_i32 : i32, i32
  }
}

module attributes {stable_mosaic.version = 11 : i64} {
  func.func @gcn_layer_kernel(%arg0: i32, %arg1: i32, %arg2: memref<128x128xbf16, #tpu.memory_space<vmem>>, %arg3: memref<128x128xbf16, #tpu.memory_space<vmem>>, %arg4: memref<128x128xf32, #tpu.memory_space<vmem>>, %arg5: memref<1x128xf32, #tpu.memory_space<vmem>>, %arg6: memref<128x128xbf16, #tpu.memory_space<vmem>>, %arg7: memref<128x128xf32, #tpu.memory_space<vmem>>) attributes {dimension_semantics = [#tpu.dimension_semantics<parallel>, #tpu.dimension_semantics<arbitrary>], iteration_bounds = array<i64: 1, 1>, scalar_prefetch = 0 : i64, scratch_operands = 1 : i64, tpu.core_type = #tpu.core_type<tc>, window_params = [{transform_indices = @transform_0, window_bounds = array<i64: 128, 128>}, {transform_indices = @transform_1, window_bounds = array<i64: 128, 128>}, {pipeline_mode = #tpu.pipeline_mode<synchronous>, transform_indices = @transform_2, window_bounds = array<i64: 128, 128>}, {pipeline_mode = #tpu.pipeline_mode<synchronous>, transform_indices = @transform_3, window_bounds = array<i64: 1, 128>}, {transform_indices = @transform_4, window_bounds = array<i64: 128, 128>}]} {
    %c0_i32 = arith.constant 0 : i32
    %0 = arith.cmpi eq, %arg1, %c0_i32 : i32
    %1 = arith.extui %0 : i1 to i32
    %c0_i32_0 = arith.constant 0 : i32
    %2 = arith.cmpi ne, %1, %c0_i32_0 : i32
    scf.if %2 {
      %cst_10 = arith.constant 0.000000e+00 : f32
      %12 = vector.broadcast %cst_10 : f32 to vector<128x128xf32>
      %c0_11 = arith.constant 0 : index
      %c0_12 = arith.constant 0 : index
      %13 = vector.load %arg7[%c0_11, %c0_12] : memref<128x128xf32, #tpu.memory_space<vmem>>, vector<128x128xf32>
      tpu.vector_store %arg7[%c0_11, %c0_12], %12 {strides = array<i32>} : memref<128x128xf32, #tpu.memory_space<vmem>>, vector<128x128xf32>,
    } else {
    }
    %c0 = arith.constant 0 : index
    %c0_1 = arith.constant 0 : index
    %3 = vector.load %arg7[%c0, %c0_1] : memref<128x128xf32, #tpu.memory_space<vmem>>, vector<128x128xf32>
    %c0_2 = arith.constant 0 : index
    %c0_3 = arith.constant 0 : index
    %4 = vector.load %arg2[%c0_2, %c0_3] : memref<128x128xbf16, #tpu.memory_space<vmem>>, vector<128x128xbf16>
    %c0_4 = arith.constant 0 : index
    %c0_5 = arith.constant 0 : index
    %5 = vector.load %arg3[%c0_4, %c0_5] : memref<128x128xbf16, #tpu.memory_space<vmem>>, vector<128x128xbf16>
    %cst = arith.constant dense<0.000000e+00> : vector<128x128xf32>
    %6 = tpu.matmul %4, %5, %cst {dimension_numbers = #tpu.dot_dimension_numbers<[1], [0], [0], [1], [0, 0, 1, 1], [], []>} : vector<128x128xbf16>, vector<128x128xbf16>, vector<128x128xf32> -> vector<128x128xf32>
    %7 = arith.addf %3, %6 : vector<128x128xf32>
    %c0_6 = arith.constant 0 : index
    %c0_7 = arith.constant 0 : index
    %8 = vector.load %arg7[%c0_6, %c0_7] : memref<128x128xf32, #tpu.memory_space<vmem>>, vector<128x128xf32>
    tpu.vector_store %arg7[%c0_6, %c0_7], %7 {strides = array<i32>} : memref<128x128xf32, #tpu.memory_space<vmem>>, vector<128x128xf32>,
    %c0_i32_8 = arith.constant 0 : i32
    %9 = arith.cmpi eq, %arg1, %c0_i32_8 : i32
    %10 = arith.extui %9 : i1 to i32
    %c0_i32_9 = arith.constant 0 : i32
    %11 = arith.cmpi ne, %10, %c0_i32_9 : i32
    scf.if %11 {
      %c0_10 = arith.constant 0 : index
      %c0_11 = arith.constant 0 : index
      %12 = vector.load %arg7[%c0_10, %c0_11] : memref<128x128xf32, #tpu.memory_space<vmem>>, vector<128x128xf32>
      %c0_12 = arith.constant 0 : index
      %c0_13 = arith.constant 0 : index
      %13 = vector.load %arg4[%c0_12, %c0_13] : memref<128x128xf32, #tpu.memory_space<vmem>>, vector<128x128xf32>
      %cst_14 = arith.constant dense<0.000000e+00> : vector<128x128xf32>
      %14 = tpu.matmul %12, %13, %cst_14 {dimension_numbers = #tpu.dot_dimension_numbers<[1], [0], [0], [1], [0, 0, 1, 1], [], []>} : vector<128x128xf32>, vector<128x128xf32>, vector<128x128xf32> -> vector<128x128xf32>
      %c0_15 = arith.constant 0 : index
      %c0_16 = arith.constant 0 : index
      %15 = vector.load %arg5[%c0_15, %c0_16] : memref<1x128xf32, #tpu.memory_space<vmem>>, vector<1x128xf32>
      %16 = vector.broadcast %15 : vector<1x128xf32> to vector<128x128xf32>
      %17 = arith.addf %14, %16 : vector<128x128xf32>
      %18 = arith.truncf %17 : vector<128x128xf32> to vector<128x128xbf16>
      %c0_17 = arith.constant 0 : index
      %c0_18 = arith.constant 0 : index
      %19 = vector.load %arg6[%c0_17, %c0_18] : memref<128x128xbf16, #tpu.memory_space<vmem>>, vector<128x128xbf16>
      tpu.vector_store %arg6[%c0_17, %c0_18], %18 {strides = array<i32>} : memref<128x128xbf16, #tpu.memory_space<vmem>>, vector<128x128xbf16>,
    } else {
    }
    return
  }
  func.func @transform_0(%arg0: i32, %arg1: i32) -> (i32, i32) {
    %c0_i32 = arith.constant 0 : i32
    return %arg0, %arg1 : i32, i32
  }
  func.func @transform_1(%arg0: i32, %arg1: i32) -> (i32, i32) {
    %c0_i32 = arith.constant 0 : i32
    %c0_i32_0 = arith.constant 0 : i32
    return %arg1, %c0_i32 : i32, i32
  }
  func.func @transform_2(%arg0: i32, %arg1: i32) -> (i32, i32) {
    %c0_i32 = arith.constant 0 : i32
    %c0_i32_0 = arith.constant 0 : i32
    %c0_i32_1 = arith.constant 0 : i32
    return %c0_i32, %c0_i32_0 : i32, i32
  }
  func.func @transform_3(%arg0: i32, %arg1: i32) -> (i32, i32) {
    %c0_i32 = arith.constant 0 : i32
    %c0_i32_0 = arith.constant 0 : i32
    %c0_i32_1 = arith.constant 0 : i32
    return %c0_i32, %c0_i32_0 : i32, i32
  }
  func.func @transform_4(%arg0: i32, %arg1: i32) -> (i32, i32) {
    %c0_i32 = arith.constant 0 : i32
    %c0_i32_0 = arith.constant 0 : i32
    return %arg0, %c0_i32 : i32, i32
  }
}

</mosaic_0001>

<llo_original>
// kernel: gcn_2layer.3
$region0: #{gcn_2layer.3}
  #allocation0 [shape = 'u32[]', space=smem, size = 0x4, offset = 0x4, fixed_abs, tag = 'smem constant byte address 0x4 - core index']
  #allocation1 [shape = 'u32[144,128]{1,0:T(1,128)}', space=vmem, size = 0x12000, scoped, tag = 'internal scratch']
  #allocation2 [shape = 'f32[128,128]{1,0:T(8,128)}', space=vmem, size = 0x10000, scoped, tag = 'scratch operand']
  %s0 = inlined_call_operand.vmem [shape: bf16[128,128], index: 0, kind: input, shape index: {}]
  %s1 = inlined_call_operand.vmem [shape: bf16[128,128], index: 1, kind: input, shape index: {}]
  %s2 = inlined_call_operand.vmem [shape: f32[128,128], index: 2, kind: input, shape index: {}]
  %s3 = inlined_call_operand.vmem [shape: f32[1,128], index: 3, kind: input, shape index: {}]
  %s4 = inlined_call_operand.vmem [shape: f32[128,128], index: 4, kind: output, shape index: {}]
  %s5 = sld [smem:[#allocation0]]
  $region34: #{gcn_2layer.3} parent=0
    _
  %s7 = ssub.s32 1, %s5
  %s8 = scalar_select 0, %s7, %s5
  // Predicated region
  $region2: #{gcn_2layer.3} parent=0 // pred_check
    _
  $region3: #{gcn_2layer.3} parent=0 // pred_check_branch
    %10 = sbr.rel (0) target = $region5
  $region4: #{gcn_2layer.3} parent=0 // pred_region
    _
  $region5: #{gcn_2layer.3} parent=0 // pred_fallthru
    _
  // Predicated region
  $region6: #{gcn_2layer.3} parent=0 // pred_check
    _
  $region7: #{gcn_2layer.3} parent=0 // pred_check_branch
    %12 = sbr.rel (0) target = $region9
  $region8: #{gcn_2layer.3} parent=0 // pred_region
    _
  $region9: #{gcn_2layer.3} parent=0 // pred_fallthru
    _
  // Predicated region
  $region10: #{gcn_2layer.3} parent=0 // pred_check
    _
  $region11: #{gcn_2layer.3} parent=0 // pred_check_branch
    %14 = sbr.rel (0) target = $region13
  $region12: #{gcn_2layer.3} parent=0 // pred_region
    _
  $region13: #{gcn_2layer.3} parent=0 // pred_fallthru
    _
  // Predicated region
  $region14: #{gcn_2layer.3} parent=0 // pred_check
    _
  $region15: #{gcn_2layer.3} parent=0 // pred_check_branch
    %16 = sbr.rel (0) target = $region17
  $region16: #{gcn_2layer.3} parent=0 // pred_region
    _
  $region17: #{gcn_2layer.3} parent=0 // pred_fallthru
    _
  %p18 = scmp.eq.s32.totalorder 0, 0
  // Predicated region
  $region18: #{gcn_2layer.3} parent=0 // pred_check
    %p19 = pneg %p18
  $region19: #{gcn_2layer.3} parent=0 // pred_check_branch
    %21 = sbr.rel (%p19) target = $region21
  $region20: #{gcn_2layer.3} parent=0 // pred_region
    %22 = vst [vmem:[#allocation2] sm:$0xff] 0.0
    %23 = vst [vmem:[#allocation2 + $0x8] sm:$0xff] 0.0
    %24 = vst [vmem:[#allocation2 + $0x10] sm:$0xff] 0.0
    %25 = vst [vmem:[#allocation2 + $0x18] sm:$0xff] 0.0
    %26 = vst [vmem:[#allocation2 + $0x20] sm:$0xff] 0.0
    %27 = vst [vmem:[#allocation2 + $0x28] sm:$0xff] 0.0
    %28 = vst [vmem:[#allocation2 + $0x30] sm:$0xff] 0.0
    %29 = vst [vmem:[#allocation2 + $0x38] sm:$0xff] 0.0
    %30 = vst [vmem:[#allocation2 + $0x40] sm:$0xff] 0.0
    %31 = vst [vmem:[#allocation2 + $0x48] sm:$0xff] 0.0
    %32 = vst [vmem:[#allocation2 + $0x50] sm:$0xff] 0.0
    %33 = vst [vmem:[#allocation2 + $0x58] sm:$0xff] 0.0
    %34 = vst [vmem:[#allocation2 + $0x60] sm:$0xff] 0.0
    %35 = vst [vmem:[#allocation2 + $0x68] sm:$0xff] 0.0
    %36 = vst [vmem:[#allocation2 + $0x70] sm:$0xff] 0.0
    %37 = vst [vmem:[#allocation2 + $0x78] sm:$0xff] 0.0
  $region21: #{gcn_2layer.3} parent=0 // pred_fallthru
    _
  %v38 = vld [vmem:[#allocation2] sm:$0xff]
  %v39 = vld [vmem:[#allocation2 + $0x8] sm:$0xff]
  %v40 = vld [vmem:[#allocation2 + $0x10] sm:$0xff]
  %v41 = vld [vmem:[#allocation2 + $0x18] sm:$0xff]
  %v42 = vld [vmem:[#allocation2 + $0x20] sm:$0xff]
  %v43 = vld [vmem:[#allocation2 + $0x28] sm:$0xff]
  %v44 = vld [vmem:[#allocation2 + $0x30] sm:$0xff]
  %v45 = vld [vmem:[#allocation2 + $0x38] sm:$0xff]
  %v46 = vld [vmem:[#allocation2 + $0x40] sm:$0xff]
  %v47 = vld [vmem:[#allocation2 + $0x48] sm:$0xff]
  %v48 = vld [vmem:[#allocation2 + $0x50] sm:$0xff]
  %v49 = vld [vmem:[#allocation2 + $0x58] sm:$0xff]
  %v50 = vld [vmem:[#allocation2 + $0x60] sm:$0xff]
  %v51 = vld [vmem:[#allocation2 + $0x68] sm:$0xff]
  %v52 = vld [vmem:[#allocation2 + $0x70] sm:$0xff]
  %v53 = vld [vmem:[#allocation2 + $0x78] sm:$0xff]
  %v54 = vld [vmem:[%s0] sm:$0xf]
  %v55 = vld [vmem:[%s0 + $0x4] sm:$0xf]
  %v56 = vld [vmem:[%s0 + $0x8] sm:$0xf]
  %v57 = vld [vmem:[%s0 + $0xc] sm:$0xf]
  %v58 = vld [vmem:[%s0 + $0x10] sm:$0xf]
  %v59 = vld [vmem:[%s0 + $0x14] sm:$0xf]
  %v60 = vld [vmem:[%s0 + $0x18] sm:$0xf]
  %v61 = vld [vmem:[%s0 + $0x1c] sm:$0xf]
  %v62 = vld [vmem:[%s0 + $0x20] sm:$0xf]
  %v63 = vld [vmem:[%s0 + $0x24] sm:$0xf]
  %v64 = vld [vmem:[%s0 + $0x28] sm:$0xf]
  %v65 = vld [vmem:[%s0 + $0x2c] sm:$0xf]
  %v66 = vld [vmem:[%s0 + $0x30] sm:$0xf]
  %v67 = vld [vmem:[%s0 + $0x34] sm:$0xf]
  %v68 = vld [vmem:[%s0 + $0x38] sm:$0xf]
  %v69 = vld [vmem:[%s0 + $0x3c] sm:$0xf]
  %v70 = vld [vmem:[%s1] sm:$0xf]
  %v71 = vld [vmem:[%s1 + $0x4] sm:$0xf]
  %v72 = vld [vmem:[%s1 + $0x8] sm:$0xf]
  %v73 = vld [vmem:[%s1 + $0xc] sm:$0xf]
  %v74 = vld [vmem:[%s1 + $0x10] sm:$0xf]
  %v75 = vld [vmem:[%s1 + $0x14] sm:$0xf]
  %v76 = vld [vmem:[%s1 + $0x18] sm:$0xf]
  %v77 = vld [vmem:[%s1 + $0x1c] sm:$0xf]
  %v78 = vld [vmem:[%s1 + $0x20] sm:$0xf]
  %v79 = vld [vmem:[%s1 + $0x24] sm:$0xf]
  %v80 = vld [vmem:[%s1 + $0x28] sm:$0xf]
  %v81 = vld [vmem:[%s1 + $0x2c] sm:$0xf]
  %v82 = vld [vmem:[%s1 + $0x30] sm:$0xf]
  %v83 = vld [vmem:[%s1 + $0x34] sm:$0xf]
  %v84 = vld [vmem:[%s1 + $0x38] sm:$0xf]
  %v85 = vld [vmem:[%s1 + $0x3c] sm:$0xf]
  %v102 = vunpack.c.l.b16 %v54
  %v103 = vunpack.c.l.b16 %v55
  %v104 = vunpack.c.l.b16 %v56
  %v105 = vunpack.c.l.b16 %v57
  %v106 = vunpack.c.l.b16 %v58
  %v107 = vunpack.c.l.b16 %v59
  %v108 = vunpack.c.l.b16 %v60
  %v109 = vunpack.c.l.b16 %v61
  %v110 = vunpack.c.l.b16 %v62
  %v111 = vunpack.c.l.b16 %v63
  %v112 = vunpack.c.l.b16 %v64
  %v113 = vunpack.c.l.b16 %v65
  %v114 = vunpack.c.l.b16 %v66
  %v115 = vunpack.c.l.b16 %v67
  %v116 = vunpack.c.l.b16 %v68
  %v117 = vunpack.c.l.b16 %v69
  %v118 = vpack.c.b16 %v103, %v102
  %v119 = vpack.c.b16 %v105, %v104
  %v120 = vpack.c.b16 %v107, %v106
  %v121 = vpack.c.b16 %v109, %v108
  %v122 = vpack.c.b16 %v111, %v110
  %v123 = vpack.c.b16 %v113, %v112
  %v124 = vpack.c.b16 %v115, %v114
  %v125 = vpack.c.b16 %v117, %v116
  %v150 = vunpack.c.l.b16 %v70
  %v151 = vunpack.c.l.b16 %v71
  %v152 = vunpack.c.l.b16 %v72
  %v153 = vunpack.c.l.b16 %v73
  %v154 = vunpack.c.l.b16 %v74
  %v155 = vunpack.c.l.b16 %v75
  %v156 = vunpack.c.l.b16 %v76
  %v157 = vunpack.c.l.b16 %v77
  %v158 = vunpack.c.l.b16 %v78
  %v159 = vunpack.c.l.b16 %v79
  %v160 = vunpack.c.l.b16 %v80
  %v161 = vunpack.c.l.b16 %v81
  %v162 = vunpack.c.l.b16 %v82
  %v163 = vunpack.c.l.b16 %v83
  %v164 = vunpack.c.l.b16 %v84
  %v165 = vunpack.c.l.b16 %v85
  %v166 = vpack.c.b16 %v151, %v150
  %v167 = vpack.c.b16 %v153, %v152
  %v168 = vpack.c.b16 %v155, %v154
  %v169 = vpack.c.b16 %v157, %v156
  %v170 = vpack.c.b16 %v159, %v158
  %v171 = vpack.c.b16 %v161, %v160
  %v172 = vpack.c.b16 %v163, %v162
  %v173 = vpack.c.b16 %v165, %v164
  %182 = vmatprep.subr.bf16.mxu0 0
  %183 = vmatpush1.bf16.msra.mxu0 %v173
  %184 = vmatprep.subr.bf16.mxu0 0
  %185 = vmatpush1.bf16.msra.mxu0 %v172
  %186 = vmatprep.subr.bf16.mxu0 0
  %187 = vmatpush1.bf16.msra.mxu0 %v171
  %188 = vmatprep.subr.bf16.mxu0 0
  %189 = vmatpush1.bf16.msra.mxu0 %v170
  %190 = vmatprep.subr.bf16.mxu0 0
  %191 = vmatpush1.bf16.msra.mxu0 %v169
  %192 = vmatprep.subr.bf16.mxu0 0
  %193 = vmatpush1.bf16.msra.mxu0 %v168
  %194 = vmatprep.subr.bf16.mxu0 0
  %195 = vmatpush1.bf16.msra.mxu0 %v167
  %196 = vmatprep.subr.bf16.mxu0 0
  %197 = vmatpush1.bf16.msra.mxu0 %v166
  %198 = vmatprep.subr.bf16.mxu0 0
  %199 = vmatpush2.bf16.msra.mxu0 0
  %200 = vmatprep.subr.bf16.mxu0 0
  %201 = vmatpush2.bf16.msra.mxu0 0
  %202 = vmatprep.subr.bf16.mxu0 0
  %203 = vmatpush2.bf16.msra.mxu0 0
  %204 = vmatprep.subr.bf16.mxu0 0
  %205 = vmatpush2.bf16.msra.mxu0 0
  %206 = vmatprep.subr.bf16.mxu0 0
  %207 = vmatpush2.bf16.msra.mxu0 0
  %208 = vmatprep.subr.bf16.mxu0 0
  %209 = vmatpush2.bf16.msra.mxu0 0
  %210 = vmatprep.subr.bf16.mxu0 0
  %211 = vmatpush2.bf16.msra.mxu0 0
  %212 = vmatprep.subr.bf16.mxu0 0
  %213 = vmatpush2.bf16.msra.mxu0 0
  %214 = vmatprep.mubr.bf16.mxu0 0
  %215 = vmatmul.mubr.bf16.gmra.mxu0 %v118
  %v216 = vpop.f32.mrf.mxu0
  %v217 = vadd.f32 0.0, %v216
  %v218 = vpop.f32.mrf.mxu0
  %v219 = vpop.f32.mrf.mxu0
  %v220 = vadd.f32 0.0, %v219
  %v221 = vpop.f32.mrf.mxu0
  %222 = vmatprep.mubr.bf16.mxu0 0
  %223 = vmatmul.mubr.bf16.gmra.mxu0 %v119
  %v224 = vpop.f32.mrf.mxu0
  %v225 = vadd.f32 0.0, %v224
  %v226 = vpop.f32.mrf.mxu0
  %v227 = vpop.f32.mrf.mxu0
  %v228 = vadd.f32 0.0, %v227
  %v229 = vpop.f32.mrf.mxu0
  %230 = vmatprep.mubr.bf16.mxu0 0
  %231 = vmatmul.mubr.bf16.gmra.mxu0 %v120
  %v232 = vpop.f32.mrf.mxu0
  %v233 = vadd.f32 0.0, %v232
  %v234 = vpop.f32.mrf.mxu0
  %v235 = vpop.f32.mrf.mxu0
  %v236 = vadd.f32 0.0, %v235
  %v237 = vpop.f32.mrf.mxu0
  %238 = vmatprep.mubr.bf16.mxu0 0
  %239 = vmatmul.mubr.bf16.gmra.mxu0 %v121
  %v240 = vpop.f32.mrf.mxu0
  %v241 = vadd.f32 0.0, %v240
  %v242 = vpop.f32.mrf.mxu0
  %v243 = vpop.f32.mrf.mxu0
  %v244 = vadd.f32 0.0, %v243
  %v245 = vpop.f32.mrf.mxu0
  %246 = vmatprep.mubr.bf16.mxu0 0
  %247 = vmatmul.mubr.bf16.gmra.mxu0 %v122
  %v248 = vpop.f32.mrf.mxu0
  %v249 = vadd.f32 0.0, %v248
  %v250 = vpop.f32.mrf.mxu0
  %v251 = vpop.f32.mrf.mxu0
  %v252 = vadd.f32 0.0, %v251
  %v253 = vpop.f32.mrf.mxu0
  %254 = vmatprep.mubr.bf16.mxu0 0
  %255 = vmatmul.mubr.bf16.gmra.mxu0 %v123
  %v256 = vpop.f32.mrf.mxu0
  %v257 = vadd.f32 0.0, %v256
  %v258 = vpop.f32.mrf.mxu0
  %v259 = vpop.f32.mrf.mxu0
  %v260 = vadd.f32 0.0, %v259
  %v261 = vpop.f32.mrf.mxu0
  %262 = vmatprep.mubr.bf16.mxu0 0
  %263 = vmatmul.mubr.bf16.gmra.mxu0 %v124
  %v264 = vpop.f32.mrf.mxu0
  %v265 = vadd.f32 0.0, %v264
  %v266 = vpop.f32.mrf.mxu0
  %v267 = vpop.f32.mrf.mxu0
  %v268 = vadd.f32 0.0, %v267
  %v269 = vpop.f32.mrf.mxu0
  %270 = vmatprep.mubr.bf16.mxu0 0
  %271 = vmatmul.mubr.bf16.gmra.mxu0 %v125
  %v272 = vpop.f32.mrf.mxu0
  %v273 = vadd.f32 0.0, %v272
  %v274 = vpop.f32.mrf.mxu0
  %v275 = vpop.f32.mrf.mxu0
  %v276 = vadd.f32 0.0, %v275
  %v277 = vpop.f32.mrf.mxu0
  %278 = vdwg.mxu0
  %v279 = vadd.f32 %v38, %v217
  %v280 = vadd.f32 %v39, %v220
  %v281 = vadd.f32 %v40, %v225
  %v282 = vadd.f32 %v41, %v228
  %v283 = vadd.f32 %v42, %v233
  %v284 = vadd.f32 %v43, %v236
  %v285 = vadd.f32 %v44, %v241
  %v286 = vadd.f32 %v45, %v244
  %v287 = vadd.f32 %v46, %v249
  %v288 = vadd.f32 %v47, %v252
  %v289 = vadd.f32 %v48, %v257
  %v290 = vadd.f32 %v49, %v260
  %v291 = vadd.f32 %v50, %v265
  %v292 = vadd.f32 %v51, %v268
  %v293 = vadd.f32 %v52, %v273
  %v294 = vadd.f32 %v53, %v276
  %295 = vst [vmem:[#allocation2] sm:$0xff] %v279
  %296 = vst [vmem:[#allocation2 + $0x8] sm:$0xff] %v280
  %297 = vst [vmem:[#allocation2 + $0x10] sm:$0xff] %v281
  %298 = vst [vmem:[#allocation2 + $0x18] sm:$0xff] %v282
  %299 = vst [vmem:[#allocation2 + $0x20] sm:$0xff] %v283
  %300 = vst [vmem:[#allocation2 + $0x28] sm:$0xff] %v284
  %301 = vst [vmem:[#allocation2 + $0x30] sm:$0xff] %v285
  %302 = vst [vmem:[#allocation2 + $0x38] sm:$0xff] %v286
  %303 = vst [vmem:[#allocation2 + $0x40] sm:$0xff] %v287
  %304 = vst [vmem:[#allocation2 + $0x48] sm:$0xff] %v288
  %305 = vst [vmem:[#allocation2 + $0x50] sm:$0xff] %v289
  %306 = vst [vmem:[#allocation2 + $0x58] sm:$0xff] %v290
  %307 = vst [vmem:[#allocation2 + $0x60] sm:$0xff] %v291
  %308 = vst [vmem:[#allocation2 + $0x68] sm:$0xff] %v292
  %309 = vst [vmem:[#allocation2 + $0x70] sm:$0xff] %v293
  %310 = vst [vmem:[#allocation2 + $0x78] sm:$0xff] %v294
  // Predicated region
  $region22: #{gcn_2layer.3} parent=0 // pred_check
    %p311 = pneg %p18
  $region23: #{gcn_2layer.3} parent=0 // pred_check_branch
    %313 = sbr.rel (%p311) target = $region25
  $region24: #{gcn_2layer.3} parent=0 // pred_region
    %v314 = vld [vmem:[#allocation2] sm:$0xff]
    %v315 = vld [vmem:[#allocation2 + $0x8] sm:$0xff]
    %v316 = vld [vmem:[#allocation2 + $0x10] sm:$0xff]
    %v317 = vld [vmem:[#allocation2 + $0x18] sm:$0xff]
    %v318 = vld [vmem:[#allocation2 + $0x20] sm:$0xff]
    %v319 = vld [vmem:[#allocation2 + $0x28] sm:$0xff]
    %v320 = vld [vmem:[#allocation2 + $0x30] sm:$0xff]
    %v321 = vld [vmem:[#allocation2 + $0x38] sm:$0xff]
    %v322 = vld [vmem:[#allocation2 + $0x40] sm:$0xff]
    %v323 = vld [vmem:[#allocation2 + $0x48] sm:$0xff]
    %v324 = vld [vmem:[#allocation2 + $0x50] sm:$0xff]
    %v325 = vld [vmem:[#allocation2 + $0x58] sm:$0xff]
    %v326 = vld [vmem:[#allocation2 + $0x60] sm:$0xff]
    %v327 = vld [vmem:[#allocation2 + $0x68] sm:$0xff]
    %v328 = vld [vmem:[#allocation2 + $0x70] sm:$0xff]
    %v329 = vld [vmem:[#allocation2 + $0x78] sm:$0xff]
    %v330 = vld [vmem:[%s2] sm:$0xff]
    %v331 = vld [vmem:[%s2 + $0x8] sm:$0xff]
    %v332 = vld [vmem:[%s2 + $0x10] sm:$0xff]
    %v333 = vld [vmem:[%s2 + $0x18] sm:$0xff]
    %v334 = vld [vmem:[%s2 + $0x20] sm:$0xff]
    %v335 = vld [vmem:[%s2 + $0x28] sm:$0xff]
    %v336 = vld [vmem:[%s2 + $0x30] sm:$0xff]
    %v337 = vld [vmem:[%s2 + $0x38] sm:$0xff]
    %v338 = vld [vmem:[%s2 + $0x40] sm:$0xff]
    %v339 = vld [vmem:[%s2 + $0x48] sm:$0xff]
    %v340 = vld [vmem:[%s2 + $0x50] sm:$0xff]
    %v341 = vld [vmem:[%s2 + $0x58] sm:$0xff]
    %v342 = vld [vmem:[%s2 + $0x60] sm:$0xff]
    %v343 = vld [vmem:[%s2 + $0x68] sm:$0xff]
    %v344 = vld [vmem:[%s2 + $0x70] sm:$0xff]
    %v345 = vld [vmem:[%s2 + $0x78] sm:$0xff]
    %v346 = vld [vmem:[%s3] sm:$0x1]
    %v348 = vlaneseq
    %v349 = vshrl.u32 %v348, 7
    %v350 = vsub.s32 0, %v349
    %v351 = vrot.slane %v346, %v350
    %353 = vmatprep.subr.mxu0 0.0
    %354 = vmatpush1.msra.mxu0 %v345
    %355 = vmatprep.subr.mxu0 0.0
    %356 = vmatpush1.msra.mxu0 %v344
    %357 = vmatprep.subr.mxu0 0.0
    %358 = vmatpush1.msra.mxu0 %v343
    %359 = vmatprep.subr.mxu0 0.0
    %360 = vmatpush1.msra.mxu0 %v342
    %361 = vmatprep.subr.mxu0 0.0
    %362 = vmatpush1.msra.mxu0 %v341
    %363 = vmatprep.subr.mxu0 0.0
    %364 = vmatpush1.msra.mxu0 %v340
    %365 = vmatprep.subr.mxu0 0.0
    %366 = vmatpush1.msra.mxu0 %v339
    %367 = vmatprep.subr.mxu0 0.0
    %368 = vmatpush1.msra.mxu0 %v338
    %369 = vmatprep.subr.mxu0 0.0
    %370 = vmatpush1.msra.mxu0 %v337
    %371 = vmatprep.subr.mxu0 0.0
    %372 = vmatpush1.msra.mxu0 %v336
    %373 = vmatprep.subr.mxu0 0.0
    %374 = vmatpush1.msra.mxu0 %v335
    %375 = vmatprep.subr.mxu0 0.0
    %376 = vmatpush1.msra.mxu0 %v334
    %377 = vmatprep.subr.mxu0 0.0
    %378 = vmatpush1.msra.mxu0 %v333
    %379 = vmatprep.subr.mxu0 0.0
    %380 = vmatpush1.msra.mxu0 %v332
    %381 = vmatprep.subr.mxu0 0.0
    %382 = vmatpush1.msra.mxu0 %v331
    %383 = vmatprep.subr.mxu0 0.0
    %384 = vmatpush1.msra.mxu0 %v330
    %385 = vmatprep.subr.mxu0 0.0
    %386 = vmatpush2.msra.mxu0 0.0
    %387 = vmatprep.subr.mxu0 0.0
    %388 = vmatpush2.msra.mxu0 0.0
    %389 = vmatprep.subr.mxu0 0.0
    %390 = vmatpush2.msra.mxu0 0.0
    %391 = vmatprep.subr.mxu0 0.0
    %392 = vmatpush2.msra.mxu0 0.0
    %393 = vmatprep.subr.mxu0 0.0
    %394 = vmatpush2.msra.mxu0 0.0
    %395 = vmatprep.subr.mxu0 0.0
    %396 = vmatpush2.msra.mxu0 0.0
    %397 = vmatprep.subr.mxu0 0.0
    %398 = vmatpush2.msra.mxu0 0.0
    %399 = vmatprep.subr.mxu0 0.0
    %400 = vmatpush2.msra.mxu0 0.0
    %401 = vmatprep.subr.mxu0 0.0
    %402 = vmatpush2.msra.mxu0 0.0
    %403 = vmatprep.subr.mxu0 0.0
    %404 = vmatpush2.msra.mxu0 0.0
    %405 = vmatprep.subr.mxu0 0.0
    %406 = vmatpush2.msra.mxu0 0.0
    %407 = vmatprep.subr.mxu0 0.0
    %408 = vmatpush2.msra.mxu0 0.0
    %409 = vmatprep.subr.mxu0 0.0
    %410 = vmatpush2.msra.mxu0 0.0
    %411 = vmatprep.subr.mxu0 0.0
    %412 = vmatpush2.msra.mxu0 0.0
    %413 = vmatprep.subr.mxu0 0.0
    %414 = vmatpush2.msra.mxu0 0.0
    %415 = vmatprep.subr.mxu0 0.0
    %416 = vmatpush2.msra.mxu0 0.0
    %417 = vmatprep.mubr.f32.mxu0 0.0
    %418 = vmatmul.mubr.f32.gmra.mxu0 %v314
    %v419 = vpop.f32.mrf.mxu0
    %v420 = vadd.f32 %v351, %v419
    %v421 = vpop.f32.mrf.mxu0
    %422 = vmatprep.mubr.f32.mxu0 0.0
    %423 = vmatmul.mubr.f32.gmra.mxu0 %v315
    %v424 = vpop.f32.mrf.mxu0
    %v425 = vadd.f32 %v351, %v424
    %v426 = vpop.f32.mrf.mxu0
    %427 = vmatprep.mubr.f32.mxu0 0.0
    %428 = vmatmul.mubr.f32.gmra.mxu0 %v316
    %v429 = vpop.f32.mrf.mxu0
    %v430 = vadd.f32 %v351, %v429
    %v431 = vpop.f32.mrf.mxu0
    %432 = vmatprep.mubr.f32.mxu0 0.0
    %433 = vmatmul.mubr.f32.gmra.mxu0 %v317
    %v434 = vpop.f32.mrf.mxu0
    %v435 = vadd.f32 %v351, %v434
    %v436 = vpop.f32.mrf.mxu0
    %437 = vmatprep.mubr.f32.mxu0 0.0
    %438 = vmatmul.mubr.f32.gmra.mxu0 %v318
    %v439 = vpop.f32.mrf.mxu0
    %v440 = vadd.f32 %v351, %v439
    %v441 = vpop.f32.mrf.mxu0
    %442 = vmatprep.mubr.f32.mxu0 0.0
    %443 = vmatmul.mubr.f32.gmra.mxu0 %v319
    %v444 = vpop.f32.mrf.mxu0
    %v445 = vadd.f32 %v351, %v444
    %v446 = vpop.f32.mrf.mxu0
    %447 = vmatprep.mubr.f32.mxu0 0.0
    %448 = vmatmul.mubr.f32.gmra.mxu0 %v320
    %v449 = vpop.f32.mrf.mxu0
    %v450 = vadd.f32 %v351, %v449
    %v451 = vpop.f32.mrf.mxu0
    %452 = vmatprep.mubr.f32.mxu0 0.0
    %453 = vmatmul.mubr.f32.gmra.mxu0 %v321
    %v454 = vpop.f32.mrf.mxu0
    %v455 = vadd.f32 %v351, %v454
    %v456 = vpop.f32.mrf.mxu0
    %457 = vmatprep.mubr.f32.mxu0 0.0
    %458 = vmatmul.mubr.f32.gmra.mxu0 %v322
    %v459 = vpop.f32.mrf.mxu0
    %v460 = vadd.f32 %v351, %v459
    %v461 = vpop.f32.mrf.mxu0
    %462 = vmatprep.mubr.f32.mxu0 0.0
    %463 = vmatmul.mubr.f32.gmra.mxu0 %v323
    %v464 = vpop.f32.mrf.mxu0
    %v465 = vadd.f32 %v351, %v464
    %v466 = vpop.f32.mrf.mxu0
    %467 = vmatprep.mubr.f32.mxu0 0.0
    %468 = vmatmul.mubr.f32.gmra.mxu0 %v324
    %v469 = vpop.f32.mrf.mxu0
    %v470 = vadd.f32 %v351, %v469
    %v471 = vpop.f32.mrf.mxu0
    %472 = vmatprep.mubr.f32.mxu0 0.0
    %473 = vmatmul.mubr.f32.gmra.mxu0 %v325
    %v474 = vpop.f32.mrf.mxu0
    %v475 = vadd.f32 %v351, %v474
    %v476 = vpop.f32.mrf.mxu0
    %477 = vmatprep.mubr.f32.mxu0 0.0
    %478 = vmatmul.mubr.f32.gmra.mxu0 %v326
    %v479 = vpop.f32.mrf.mxu0
    %v480 = vadd.f32 %v351, %v479
    %v481 = vpop.f32.mrf.mxu0
    %482 = vmatprep.mubr.f32.mxu0 0.0
    %483 = vmatmul.mubr.f32.gmra.mxu0 %v327
    %v484 = vpop.f32.mrf.mxu0
    %v485 = vadd.f32 %v351, %v484
    %v486 = vpop.f32.mrf.mxu0
    %487 = vmatprep.mubr.f32.mxu0 0.0
    %488 = vmatmul.mubr.f32.gmra.mxu0 %v328
    %v489 = vpop.f32.mrf.mxu0
    %v490 = vadd.f32 %v351, %v489
    %v491 = vpop.f32.mrf.mxu0
    %492 = vmatprep.mubr.f32.mxu0 0.0
    %493 = vmatmul.mubr.f32.gmra.mxu0 %v329
    %v494 = vpop.f32.mrf.mxu0
    %v495 = vadd.f32 %v351, %v494
    %v496 = vpop.f32.mrf.mxu0
    %497 = vdwg.mxu0
    %498 = vst [vmem:[%s4] sm:$0xff] %v420
    %499 = vst [vmem:[%s4 + $0x8] sm:$0xff] %v425
    %500 = vst [vmem:[%s4 + $0x10] sm:$0xff] %v430
    %501 = vst [vmem:[%s4 + $0x18] sm:$0xff] %v435
    %502 = vst [vmem:[%s4 + $0x20] sm:$0xff] %v440
    %503 = vst [vmem:[%s4 + $0x28] sm:$0xff] %v445
    %504 = vst [vmem:[%s4 + $0x30] sm:$0xff] %v450
    %505 = vst [vmem:[%s4 + $0x38] sm:$0xff] %v455
    %506 = vst [vmem:[%s4 + $0x40] sm:$0xff] %v460
    %507 = vst [vmem:[%s4 + $0x48] sm:$0xff] %v465
    %508 = vst [vmem:[%s4 + $0x50] sm:$0xff] %v470
    %509 = vst [vmem:[%s4 + $0x58] sm:$0xff] %v475
    %510 = vst [vmem:[%s4 + $0x60] sm:$0xff] %v480
    %511 = vst [vmem:[%s4 + $0x68] sm:$0xff] %v485
    %512 = vst [vmem:[%s4 + $0x70] sm:$0xff] %v490
    %513 = vst [vmem:[%s4 + $0x78] sm:$0xff] %v495
  $region25: #{gcn_2layer.3} parent=0 // pred_fallthru
    _
  // Predicated region
  $region26: #{gcn_2layer.3} parent=0 // pred_check
    _
  $region27: #{gcn_2layer.3} parent=0 // pred_check_branch
    %515 = sbr.rel (0) target = $region29
  $region28: #{gcn_2layer.3} parent=0 // pred_region
    _
  $region29: #{gcn_2layer.3} parent=0 // pred_fallthru
    _
  // Predicated region
  $region30: #{gcn_2layer.3} parent=0 // pred_check
    _
  $region31: #{gcn_2layer.3} parent=0 // pred_check_branch
    %517 = sbr.rel (0) target = $region33
  $region32: #{gcn_2layer.3} parent=0 // pred_region
    _
  $region33: #{gcn_2layer.3} parent=0 // pred_fallthru
    _

// kernel: gcn_2layer.2
$region0: #{gcn_2layer.2}
  #allocation0 [shape = 'u32[]', space=smem, size = 0x4, offset = 0x4, fixed_abs, tag = 'smem constant byte address 0x4 - core index']
  #allocation1 [shape = 'u32[144,128]{1,0:T(1,128)}', space=vmem, size = 0x12000, scoped, tag = 'internal scratch']
  #allocation2 [shape = 'f32[128,128]{1,0:T(8,128)}', space=vmem, size = 0x10000, scoped, tag = 'scratch operand']
  %s0 = inlined_call_operand.vmem [shape: bf16[128,128], index: 0, kind: input, shape index: {}]
  %s1 = inlined_call_operand.vmem [shape: bf16[128,128], index: 1, kind: input, shape index: {}]
  %s2 = inlined_call_operand.vmem [shape: f32[128,128], index: 2, kind: input, shape index: {}]
  %s3 = inlined_call_operand.vmem [shape: f32[1,128], index: 3, kind: input, shape index: {}]
  %s4 = inlined_call_operand.vmem [shape: bf16[128,128], index: 4, kind: output, shape index: {}]
  %s5 = sld [smem:[#allocation0]]
  $region34: #{gcn_2layer.2} parent=0
    _
  %s7 = ssub.s32 1, %s5
  %s8 = scalar_select 0, %s7, %s5
  // Predicated region
  $region2: #{gcn_2layer.2} parent=0 // pred_check
    _
  $region3: #{gcn_2layer.2} parent=0 // pred_check_branch
    %10 = sbr.rel (0) target = $region5
  $region4: #{gcn_2layer.2} parent=0 // pred_region
    _
  $region5: #{gcn_2layer.2} parent=0 // pred_fallthru
    _
  // Predicated region
  $region6: #{gcn_2layer.2} parent=0 // pred_check
    _
  $region7: #{gcn_2layer.2} parent=0 // pred_check_branch
    %12 = sbr.rel (0) target = $region9
  $region8: #{gcn_2layer.2} parent=0 // pred_region
    _
  $region9: #{gcn_2layer.2} parent=0 // pred_fallthru
    _
  // Predicated region
  $region10: #{gcn_2layer.2} parent=0 // pred_check
    _
  $region11: #{gcn_2layer.2} parent=0 // pred_check_branch
    %14 = sbr.rel (0) target = $region13
  $region12: #{gcn_2layer.2} parent=0 // pred_region
    _
  $region13: #{gcn_2layer.2} parent=0 // pred_fallthru
    _
  // Predicated region
  $region14: #{gcn_2layer.2} parent=0 // pred_check
    _
  $region15: #{gcn_2layer.2} parent=0 // pred_check_branch
    %16 = sbr.rel (0) target = $region17
  $region16: #{gcn_2layer.2} parent=0 // pred_region
    _
  $region17: #{gcn_2layer.2} parent=0 // pred_fallthru
    _
  %p18 = scmp.eq.s32.totalorder 0, 0
  // Predicated region
  $region18: #{gcn_2layer.2} parent=0 // pred_check
    %p19 = pneg %p18
  $region19: #{gcn_2layer.2} parent=0 // pred_check_branch
    %21 = sbr.rel (%p19) target = $region21
  $region20: #{gcn_2layer.2} parent=0 // pred_region
    %22 = vst [vmem:[#allocation2] sm:$0xff] 0.0
    %23 = vst [vmem:[#allocation2 + $0x8] sm:$0xff] 0.0
    %24 = vst [vmem:[#allocation2 + $0x10] sm:$0xff] 0.0
    %25 = vst [vmem:[#allocation2 + $0x18] sm:$0xff] 0.0
    %26 = vst [vmem:[#allocation2 + $0x20] sm:$0xff] 0.0
    %27 = vst [vmem:[#allocation2 + $0x28] sm:$0xff] 0.0
    %28 = vst [vmem:[#allocation2 + $0x30] sm:$0xff] 0.0
    %29 = vst [vmem:[#allocation2 + $0x38] sm:$0xff] 0.0
    %30 = vst [vmem:[#allocation2 + $0x40] sm:$0xff] 0.0
    %31 = vst [vmem:[#allocation2 + $0x48] sm:$0xff] 0.0
    %32 = vst [vmem:[#allocation2 + $0x50] sm:$0xff] 0.0
    %33 = vst [vmem:[#allocation2 + $0x58] sm:$0xff] 0.0
    %34 = vst [vmem:[#allocation2 + $0x60] sm:$0xff] 0.0
    %35 = vst [vmem:[#allocation2 + $0x68] sm:$0xff] 0.0
    %36 = vst [vmem:[#allocation2 + $0x70] sm:$0xff] 0.0
    %37 = vst [vmem:[#allocation2 + $0x78] sm:$0xff] 0.0
  $region21: #{gcn_2layer.2} parent=0 // pred_fallthru
    _
  %v38 = vld [vmem:[#allocation2] sm:$0xff]
  %v39 = vld [vmem:[#allocation2 + $0x8] sm:$0xff]
  %v40 = vld [vmem:[#allocation2 + $0x10] sm:$0xff]
  %v41 = vld [vmem:[#allocation2 + $0x18] sm:$0xff]
  %v42 = vld [vmem:[#allocation2 + $0x20] sm:$0xff]
  %v43 = vld [vmem:[#allocation2 + $0x28] sm:$0xff]
  %v44 = vld [vmem:[#allocation2 + $0x30] sm:$0xff]
  %v45 = vld [vmem:[#allocation2 + $0x38] sm:$0xff]
  %v46 = vld [vmem:[#allocation2 + $0x40] sm:$0xff]
  %v47 = vld [vmem:[#allocation2 + $0x48] sm:$0xff]
  %v48 = vld [vmem:[#allocation2 + $0x50] sm:$0xff]
  %v49 = vld [vmem:[#allocation2 + $0x58] sm:$0xff]
  %v50 = vld [vmem:[#allocation2 + $0x60] sm:$0xff]
  %v51 = vld [vmem:[#allocation2 + $0x68] sm:$0xff]
  %v52 = vld [vmem:[#allocation2 + $0x70] sm:$0xff]
  %v53 = vld [vmem:[#allocation2 + $0x78] sm:$0xff]
  %v54 = vld [vmem:[%s0] sm:$0xf]
  %v55 = vld [vmem:[%s0 + $0x4] sm:$0xf]
  %v56 = vld [vmem:[%s0 + $0x8] sm:$0xf]
  %v57 = vld [vmem:[%s0 + $0xc] sm:$0xf]
  %v58 = vld [vmem:[%s0 + $0x10] sm:$0xf]
  %v59 = vld [vmem:[%s0 + $0x14] sm:$0xf]
  %v60 = vld [vmem:[%s0 + $0x18] sm:$0xf]
  %v61 = vld [vmem:[%s0 + $0x1c] sm:$0xf]
  %v62 = vld [vmem:[%s0 + $0x20] sm:$0xf]
  %v63 = vld [vmem:[%s0 + $0x24] sm:$0xf]
  %v64 = vld [vmem:[%s0 + $0x28] sm:$0xf]
  %v65 = vld [vmem:[%s0 + $0x2c] sm:$0xf]
  %v66 = vld [vmem:[%s0 + $0x30] sm:$0xf]
  %v67 = vld [vmem:[%s0 + $0x34] sm:$0xf]
  %v68 = vld [vmem:[%s0 + $0x38] sm:$0xf]
  %v69 = vld [vmem:[%s0 + $0x3c] sm:$0xf]
  %v70 = vld [vmem:[%s1] sm:$0xf]
  %v71 = vld [vmem:[%s1 + $0x4] sm:$0xf]
  %v72 = vld [vmem:[%s1 + $0x8] sm:$0xf]
  %v73 = vld [vmem:[%s1 + $0xc] sm:$0xf]
  %v74 = vld [vmem:[%s1 + $0x10] sm:$0xf]
  %v75 = vld [vmem:[%s1 + $0x14] sm:$0xf]
  %v76 = vld [vmem:[%s1 + $0x18] sm:$0xf]
  %v77 = vld [vmem:[%s1 + $0x1c] sm:$0xf]
  %v78 = vld [vmem:[%s1 + $0x20] sm:$0xf]
  %v79 = vld [vmem:[%s1 + $0x24] sm:$0xf]
  %v80 = vld [vmem:[%s1 + $0x28] sm:$0xf]
  %v81 = vld [vmem:[%s1 + $0x2c] sm:$0xf]
  %v82 = vld [vmem:[%s1 + $0x30] sm:$0xf]
  %v83 = vld [vmem:[%s1 + $0x34] sm:$0xf]
  %v84 = vld [vmem:[%s1 + $0x38] sm:$0xf]
  %v85 = vld [vmem:[%s1 + $0x3c] sm:$0xf]
  %v102 = vunpack.c.l.b16 %v54
  %v103 = vunpack.c.l.b16 %v55
  %v104 = vunpack.c.l.b16 %v56
  %v105 = vunpack.c.l.b16 %v57
  %v106 = vunpack.c.l.b16 %v58
  %v107 = vunpack.c.l.b16 %v59
  %v108 = vunpack.c.l.b16 %v60
  %v109 = vunpack.c.l.b16 %v61
  %v110 = vunpack.c.l.b16 %v62
  %v111 = vunpack.c.l.b16 %v63
  %v112 = vunpack.c.l.b16 %v64
  %v113 = vunpack.c.l.b16 %v65
  %v114 = vunpack.c.l.b16 %v66
  %v115 = vunpack.c.l.b16 %v67
  %v116 = vunpack.c.l.b16 %v68
  %v117 = vunpack.c.l.b16 %v69
  %v118 = vpack.c.b16 %v103, %v102
  %v119 = vpack.c.b16 %v105, %v104
  %v120 = vpack.c.b16 %v107, %v106
  %v121 = vpack.c.b16 %v109, %v108
  %v122 = vpack.c.b16 %v111, %v110
  %v123 = vpack.c.b16 %v113, %v112
  %v124 = vpack.c.b16 %v115, %v114
  %v125 = vpack.c.b16 %v117, %v116
  %v150 = vunpack.c.l.b16 %v70
  %v151 = vunpack.c.l.b16 %v71
  %v152 = vunpack.c.l.b16 %v72
  %v153 = vunpack.c.l.b16 %v73
  %v154 = vunpack.c.l.b16 %v74
  %v155 = vunpack.c.l.b16 %v75
  %v156 = vunpack.c.l.b16 %v76
  %v157 = vunpack.c.l.b16 %v77
  %v158 = vunpack.c.l.b16 %v78
  %v159 = vunpack.c.l.b16 %v79
  %v160 = vunpack.c.l.b16 %v80
  %v161 = vunpack.c.l.b16 %v81
  %v162 = vunpack.c.l.b16 %v82
  %v163 = vunpack.c.l.b16 %v83
  %v164 = vunpack.c.l.b16 %v84
  %v165 = vunpack.c.l.b16 %v85
  %v166 = vpack.c.b16 %v151, %v150
  %v167 = vpack.c.b16 %v153, %v152
  %v168 = vpack.c.b16 %v155, %v154
  %v169 = vpack.c.b16 %v157, %v156
  %v170 = vpack.c.b16 %v159, %v158
  %v171 = vpack.c.b16 %v161, %v160
  %v172 = vpack.c.b16 %v163, %v162
  %v173 = vpack.c.b16 %v165, %v164
  %182 = vmatprep.subr.bf16.mxu0 0
  %183 = vmatpush1.bf16.msra.mxu0 %v173
  %184 = vmatprep.subr.bf16.mxu0 0
  %185 = vmatpush1.bf16.msra.mxu0 %v172
  %186 = vmatprep.subr.bf16.mxu0 0
  %187 = vmatpush1.bf16.msra.mxu0 %v171
  %188 = vmatprep.subr.bf16.mxu0 0
  %189 = vmatpush1.bf16.msra.mxu0 %v170
  %190 = vmatprep.subr.bf16.mxu0 0
  %191 = vmatpush1.bf16.msra.mxu0 %v169
  %192 = vmatprep.subr.bf16.mxu0 0
  %193 = vmatpush1.bf16.msra.mxu0 %v168
  %194 = vmatprep.subr.bf16.mxu0 0
  %195 = vmatpush1.bf16.msra.mxu0 %v167
  %196 = vmatprep.subr.bf16.mxu0 0
  %197 = vmatpush1.bf16.msra.mxu0 %v166
  %198 = vmatprep.subr.bf16.mxu0 0
  %199 = vmatpush2.bf16.msra.mxu0 0
  %200 = vmatprep.subr.bf16.mxu0 0
  %201 = vmatpush2.bf16.msra.mxu0 0
  %202 = vmatprep.subr.bf16.mxu0 0
  %203 = vmatpush2.bf16.msra.mxu0 0
  %204 = vmatprep.subr.bf16.mxu0 0
  %205 = vmatpush2.bf16.msra.mxu0 0
  %206 = vmatprep.subr.bf16.mxu0 0
  %207 = vmatpush2.bf16.msra.mxu0 0
  %208 = vmatprep.subr.bf16.mxu0 0
  %209 = vmatpush2.bf16.msra.mxu0 0
  %210 = vmatprep.subr.bf16.mxu0 0
  %211 = vmatpush2.bf16.msra.mxu0 0
  %212 = vmatprep.subr.bf16.mxu0 0
  %213 = vmatpush2.bf16.msra.mxu0 0
  %214 = vmatprep.mubr.bf16.mxu0 0
  %215 = vmatmul.mubr.bf16.gmra.mxu0 %v118
  %v216 = vpop.f32.mrf.mxu0
  %v217 = vadd.f32 0.0, %v216
  %v218 = vpop.f32.mrf.mxu0
  %v219 = vpop.f32.mrf.mxu0
  %v220 = vadd.f32 0.0, %v219
  %v221 = vpop.f32.mrf.mxu0
  %222 = vmatprep.mubr.bf16.mxu0 0
  %223 = vmatmul.mubr.bf16.gmra.mxu0 %v119
  %v224 = vpop.f32.mrf.mxu0
  %v225 = vadd.f32 0.0, %v224
  %v226 = vpop.f32.mrf.mxu0
  %v227 = vpop.f32.mrf.mxu0
  %v228 = vadd.f32 0.0, %v227
  %v229 = vpop.f32.mrf.mxu0
  %230 = vmatprep.mubr.bf16.mxu0 0
  %231 = vmatmul.mubr.bf16.gmra.mxu0 %v120
  %v232 = vpop.f32.mrf.mxu0
  %v233 = vadd.f32 0.0, %v232
  %v234 = vpop.f32.mrf.mxu0
  %v235 = vpop.f32.mrf.mxu0
  %v236 = vadd.f32 0.0, %v235
  %v237 = vpop.f32.mrf.mxu0
  %238 = vmatprep.mubr.bf16.mxu0 0
  %239 = vmatmul.mubr.bf16.gmra.mxu0 %v121
  %v240 = vpop.f32.mrf.mxu0
  %v241 = vadd.f32 0.0, %v240
  %v242 = vpop.f32.mrf.mxu0
  %v243 = vpop.f32.mrf.mxu0
  %v244 = vadd.f32 0.0, %v243
  %v245 = vpop.f32.mrf.mxu0
  %246 = vmatprep.mubr.bf16.mxu0 0
  %247 = vmatmul.mubr.bf16.gmra.mxu0 %v122
  %v248 = vpop.f32.mrf.mxu0
  %v249 = vadd.f32 0.0, %v248
  %v250 = vpop.f32.mrf.mxu0
  %v251 = vpop.f32.mrf.mxu0
  %v252 = vadd.f32 0.0, %v251
  %v253 = vpop.f32.mrf.mxu0
  %254 = vmatprep.mubr.bf16.mxu0 0
  %255 = vmatmul.mubr.bf16.gmra.mxu0 %v123
  %v256 = vpop.f32.mrf.mxu0
  %v257 = vadd.f32 0.0, %v256
  %v258 = vpop.f32.mrf.mxu0
  %v259 = vpop.f32.mrf.mxu0
  %v260 = vadd.f32 0.0, %v259
  %v261 = vpop.f32.mrf.mxu0
  %262 = vmatprep.mubr.bf16.mxu0 0
  %263 = vmatmul.mubr.bf16.gmra.mxu0 %v124
  %v264 = vpop.f32.mrf.mxu0
  %v265 = vadd.f32 0.0, %v264
  %v266 = vpop.f32.mrf.mxu0
  %v267 = vpop.f32.mrf.mxu0
  %v268 = vadd.f32 0.0, %v267
  %v269 = vpop.f32.mrf.mxu0
  %270 = vmatprep.mubr.bf16.mxu0 0
  %271 = vmatmul.mubr.bf16.gmra.mxu0 %v125
  %v272 = vpop.f32.mrf.mxu0
  %v273 = vadd.f32 0.0, %v272
  %v274 = vpop.f32.mrf.mxu0
  %v275 = vpop.f32.mrf.mxu0
  %v276 = vadd.f32 0.0, %v275
  %v277 = vpop.f32.mrf.mxu0
  %278 = vdwg.mxu0
  %v279 = vadd.f32 %v38, %v217
  %v280 = vadd.f32 %v39, %v220
  %v281 = vadd.f32 %v40, %v225
  %v282 = vadd.f32 %v41, %v228
  %v283 = vadd.f32 %v42, %v233
  %v284 = vadd.f32 %v43, %v236
  %v285 = vadd.f32 %v44, %v241
  %v286 = vadd.f32 %v45, %v244
  %v287 = vadd.f32 %v46, %v249
  %v288 = vadd.f32 %v47, %v252
  %v289 = vadd.f32 %v48, %v257
  %v290 = vadd.f32 %v49, %v260
  %v291 = vadd.f32 %v50, %v265
  %v292 = vadd.f32 %v51, %v268
  %v293 = vadd.f32 %v52, %v273
  %v294 = vadd.f32 %v53, %v276
  %295 = vst [vmem:[#allocation2] sm:$0xff] %v279
  %296 = vst [vmem:[#allocation2 + $0x8] sm:$0xff] %v280
  %297 = vst [vmem:[#allocation2 + $0x10] sm:$0xff] %v281
  %298 = vst [vmem:[#allocation2 + $0x18] sm:$0xff] %v282
  %299 = vst [vmem:[#allocation2 + $0x20] sm:$0xff] %v283
  %300 = vst [vmem:[#allocation2 + $0x28] sm:$0xff] %v284
  %301 = vst [vmem:[#allocation2 + $0x30] sm:$0xff] %v285
  %302 = vst [vmem:[#allocation2 + $0x38] sm:$0xff] %v286
  %303 = vst [vmem:[#allocation2 + $0x40] sm:$0xff] %v287
  %304 = vst [vmem:[#allocation2 + $0x48] sm:$0xff] %v288
  %305 = vst [vmem:[#allocation2 + $0x50] sm:$0xff] %v289
  %306 = vst [vmem:[#allocation2 + $0x58] sm:$0xff] %v290
  %307 = vst [vmem:[#allocation2 + $0x60] sm:$0xff] %v291
  %308 = vst [vmem:[#allocation2 + $0x68] sm:$0xff] %v292
  %309 = vst [vmem:[#allocation2 + $0x70] sm:$0xff] %v293
  %310 = vst [vmem:[#allocation2 + $0x78] sm:$0xff] %v294
  // Predicated region
  $region22: #{gcn_2layer.2} parent=0 // pred_check
    %p311 = pneg %p18
  $region23: #{gcn_2layer.2} parent=0 // pred_check_branch
    %313 = sbr.rel (%p311) target = $region25
  $region24: #{gcn_2layer.2} parent=0 // pred_region
    %v314 = vld [vmem:[#allocation2] sm:$0xff]
    %v315 = vld [vmem:[#allocation2 + $0x8] sm:$0xff]
    %v316 = vld [vmem:[#allocation2 + $0x10] sm:$0xff]
    %v317 = vld [vmem:[#allocation2 + $0x18] sm:$0xff]
    %v318 = vld [vmem:[#allocation2 + $0x20] sm:$0xff]
    %v319 = vld [vmem:[#allocation2 + $0x28] sm:$0xff]
    %v320 = vld [vmem:[#allocation2 + $0x30] sm:$0xff]
    %v321 = vld [vmem:[#allocation2 + $0x38] sm:$0xff]
    %v322 = vld [vmem:[#allocation2 + $0x40] sm:$0xff]
    %v323 = vld [vmem:[#allocation2 + $0x48] sm:$0xff]
    %v324 = vld [vmem:[#allocation2 + $0x50] sm:$0xff]
    %v325 = vld [vmem:[#allocation2 + $0x58] sm:$0xff]
    %v326 = vld [vmem:[#allocation2 + $0x60] sm:$0xff]
    %v327 = vld [vmem:[#allocation2 + $0x68] sm:$0xff]
    %v328 = vld [vmem:[#allocation2 + $0x70] sm:$0xff]
    %v329 = vld [vmem:[#allocation2 + $0x78] sm:$0xff]
    %v330 = vld [vmem:[%s2] sm:$0xff]
    %v331 = vld [vmem:[%s2 + $0x8] sm:$0xff]
    %v332 = vld [vmem:[%s2 + $0x10] sm:$0xff]
    %v333 = vld [vmem:[%s2 + $0x18] sm:$0xff]
    %v334 = vld [vmem:[%s2 + $0x20] sm:$0xff]
    %v335 = vld [vmem:[%s2 + $0x28] sm:$0xff]
    %v336 = vld [vmem:[%s2 + $0x30] sm:$0xff]
    %v337 = vld [vmem:[%s2 + $0x38] sm:$0xff]
    %v338 = vld [vmem:[%s2 + $0x40] sm:$0xff]
    %v339 = vld [vmem:[%s2 + $0x48] sm:$0xff]
    %v340 = vld [vmem:[%s2 + $0x50] sm:$0xff]
    %v341 = vld [vmem:[%s2 + $0x58] sm:$0xff]
    %v342 = vld [vmem:[%s2 + $0x60] sm:$0xff]
    %v343 = vld [vmem:[%s2 + $0x68] sm:$0xff]
    %v344 = vld [vmem:[%s2 + $0x70] sm:$0xff]
    %v345 = vld [vmem:[%s2 + $0x78] sm:$0xff]
    %v346 = vld [vmem:[%s3] sm:$0x1]
    %v348 = vlaneseq
    %v349 = vshrl.u32 %v348, 7
    %v350 = vsub.s32 0, %v349
    %v351 = vrot.slane %v346, %v350
    %353 = vmatprep.subr.mxu0 0.0
    %354 = vmatpush1.msra.mxu0 %v345
    %355 = vmatprep.subr.mxu0 0.0
    %356 = vmatpush1.msra.mxu0 %v344
    %357 = vmatprep.subr.mxu0 0.0
    %358 = vmatpush1.msra.mxu0 %v343
    %359 = vmatprep.subr.mxu0 0.0
    %360 = vmatpush1.msra.mxu0 %v342
    %361 = vmatprep.subr.mxu0 0.0
    %362 = vmatpush1.msra.mxu0 %v341
    %363 = vmatprep.subr.mxu0 0.0
    %364 = vmatpush1.msra.mxu0 %v340
    %365 = vmatprep.subr.mxu0 0.0
    %366 = vmatpush1.msra.mxu0 %v339
    %367 = vmatprep.subr.mxu0 0.0
    %368 = vmatpush1.msra.mxu0 %v338
    %369 = vmatprep.subr.mxu0 0.0
    %370 = vmatpush1.msra.mxu0 %v337
    %371 = vmatprep.subr.mxu0 0.0
    %372 = vmatpush1.msra.mxu0 %v336
    %373 = vmatprep.subr.mxu0 0.0
    %374 = vmatpush1.msra.mxu0 %v335
    %375 = vmatprep.subr.mxu0 0.0
    %376 = vmatpush1.msra.mxu0 %v334
    %377 = vmatprep.subr.mxu0 0.0
    %378 = vmatpush1.msra.mxu0 %v333
    %379 = vmatprep.subr.mxu0 0.0
    %380 = vmatpush1.msra.mxu0 %v332
    %381 = vmatprep.subr.mxu0 0.0
    %382 = vmatpush1.msra.mxu0 %v331
    %383 = vmatprep.subr.mxu0 0.0
    %384 = vmatpush1.msra.mxu0 %v330
    %385 = vmatprep.subr.mxu0 0.0
    %386 = vmatpush2.msra.mxu0 0.0
    %387 = vmatprep.subr.mxu0 0.0
    %388 = vmatpush2.msra.mxu0 0.0
    %389 = vmatprep.subr.mxu0 0.0
    %390 = vmatpush2.msra.mxu0 0.0
    %391 = vmatprep.subr.mxu0 0.0
    %392 = vmatpush2.msra.mxu0 0.0
    %393 = vmatprep.subr.mxu0 0.0
    %394 = vmatpush2.msra.mxu0 0.0
    %395 = vmatprep.subr.mxu0 0.0
    %396 = vmatpush2.msra.mxu0 0.0
    %397 = vmatprep.subr.mxu0 0.0
    %398 = vmatpush2.msra.mxu0 0.0
    %399 = vmatprep.subr.mxu0 0.0
    %400 = vmatpush2.msra.mxu0 0.0
    %401 = vmatprep.subr.mxu0 0.0
    %402 = vmatpush2.msra.mxu0 0.0
    %403 = vmatprep.subr.mxu0 0.0
    %404 = vmatpush2.msra.mxu0 0.0
    %405 = vmatprep.subr.mxu0 0.0
    %406 = vmatpush2.msra.mxu0 0.0
    %407 = vmatprep.subr.mxu0 0.0
    %408 = vmatpush2.msra.mxu0 0.0
    %409 = vmatprep.subr.mxu0 0.0
    %410 = vmatpush2.msra.mxu0 0.0
    %411 = vmatprep.subr.mxu0 0.0
    %412 = vmatpush2.msra.mxu0 0.0
    %413 = vmatprep.subr.mxu0 0.0
    %414 = vmatpush2.msra.mxu0 0.0
    %415 = vmatprep.subr.mxu0 0.0
    %416 = vmatpush2.msra.mxu0 0.0
    %417 = vmatprep.mubr.f32.mxu0 0.0
    %418 = vmatmul.mubr.f32.gmra.mxu0 %v314
    %v419 = vpop.f32.mrf.mxu0
    %v420 = vadd.f32 %v351, %v419
    %v421 = vpop.f32.mrf.mxu0
    %422 = vmatprep.mubr.f32.mxu0 0.0
    %423 = vmatmul.mubr.f32.gmra.mxu0 %v315
    %v424 = vpop.f32.mrf.mxu0
    %v425 = vadd.f32 %v351, %v424
    %v426 = vpop.f32.mrf.mxu0
    %427 = vmatprep.mubr.f32.mxu0 0.0
    %428 = vmatmul.mubr.f32.gmra.mxu0 %v316
    %v429 = vpop.f32.mrf.mxu0
    %v430 = vadd.f32 %v351, %v429
    %v431 = vpop.f32.mrf.mxu0
    %432 = vmatprep.mubr.f32.mxu0 0.0
    %433 = vmatmul.mubr.f32.gmra.mxu0 %v317
    %v434 = vpop.f32.mrf.mxu0
    %v435 = vadd.f32 %v351, %v434
    %v436 = vpop.f32.mrf.mxu0
    %437 = vmatprep.mubr.f32.mxu0 0.0
    %438 = vmatmul.mubr.f32.gmra.mxu0 %v318
    %v439 = vpop.f32.mrf.mxu0
    %v440 = vadd.f32 %v351, %v439
    %v441 = vpop.f32.mrf.mxu0
    %442 = vmatprep.mubr.f32.mxu0 0.0
    %443 = vmatmul.mubr.f32.gmra.mxu0 %v319
    %v444 = vpop.f32.mrf.mxu0
    %v445 = vadd.f32 %v351, %v444
    %v446 = vpop.f32.mrf.mxu0
    %447 = vmatprep.mubr.f32.mxu0 0.0
    %448 = vmatmul.mubr.f32.gmra.mxu0 %v320
    %v449 = vpop.f32.mrf.mxu0
    %v450 = vadd.f32 %v351, %v449
    %v451 = vpop.f32.mrf.mxu0
    %452 = vmatprep.mubr.f32.mxu0 0.0
    %453 = vmatmul.mubr.f32.gmra.mxu0 %v321
    %v454 = vpop.f32.mrf.mxu0
    %v455 = vadd.f32 %v351, %v454
    %v456 = vpop.f32.mrf.mxu0
    %457 = vmatprep.mubr.f32.mxu0 0.0
    %458 = vmatmul.mubr.f32.gmra.mxu0 %v322
    %v459 = vpop.f32.mrf.mxu0
    %v460 = vadd.f32 %v351, %v459
    %v461 = vpop.f32.mrf.mxu0
    %462 = vmatprep.mubr.f32.mxu0 0.0
    %463 = vmatmul.mubr.f32.gmra.mxu0 %v323
    %v464 = vpop.f32.mrf.mxu0
    %v465 = vadd.f32 %v351, %v464
    %v466 = vpop.f32.mrf.mxu0
    %467 = vmatprep.mubr.f32.mxu0 0.0
    %468 = vmatmul.mubr.f32.gmra.mxu0 %v324
    %v469 = vpop.f32.mrf.mxu0
    %v470 = vadd.f32 %v351, %v469
    %v471 = vpop.f32.mrf.mxu0
    %472 = vmatprep.mubr.f32.mxu0 0.0
    %473 = vmatmul.mubr.f32.gmra.mxu0 %v325
    %v474 = vpop.f32.mrf.mxu0
    %v475 = vadd.f32 %v351, %v474
    %v476 = vpop.f32.mrf.mxu0
    %477 = vmatprep.mubr.f32.mxu0 0.0
    %478 = vmatmul.mubr.f32.gmra.mxu0 %v326
    %v479 = vpop.f32.mrf.mxu0
    %v480 = vadd.f32 %v351, %v479
    %v481 = vpop.f32.mrf.mxu0
    %482 = vmatprep.mubr.f32.mxu0 0.0
    %483 = vmatmul.mubr.f32.gmra.mxu0 %v327
    %v484 = vpop.f32.mrf.mxu0
    %v485 = vadd.f32 %v351, %v484
    %v486 = vpop.f32.mrf.mxu0
    %487 = vmatprep.mubr.f32.mxu0 0.0
    %488 = vmatmul.mubr.f32.gmra.mxu0 %v328
    %v489 = vpop.f32.mrf.mxu0
    %v490 = vadd.f32 %v351, %v489
    %v491 = vpop.f32.mrf.mxu0
    %492 = vmatprep.mubr.f32.mxu0 0.0
    %493 = vmatmul.mubr.f32.gmra.mxu0 %v329
    %v494 = vpop.f32.mrf.mxu0
    %v495 = vadd.f32 %v351, %v494
    %v496 = vpop.f32.mrf.mxu0
    %497 = vdwg.mxu0
    %v498 = vpack.c.bf16 %v425, %v420
    %v499 = vpack.c.bf16 %v435, %v430
    %v500 = vpack.c.bf16 %v445, %v440
    %v501 = vpack.c.bf16 %v455, %v450
    %v502 = vpack.c.bf16 %v465, %v460
    %v503 = vpack.c.bf16 %v475, %v470
    %v504 = vpack.c.bf16 %v485, %v480
    %v505 = vpack.c.bf16 %v495, %v490
    %v514 = vunpack.c.l.b16 %v498
    %v515 = vunpack.c.h.b16 %v498
    %v516 = vunpack.c.l.b16 %v499
    %v517 = vunpack.c.h.b16 %v499
    %v518 = vunpack.c.l.b16 %v500
    %v519 = vunpack.c.h.b16 %v500
    %v520 = vunpack.c.l.b16 %v501
    %v521 = vunpack.c.h.b16 %v501
    %v522 = vunpack.c.l.b16 %v502
    %v523 = vunpack.c.h.b16 %v502
    %v524 = vunpack.c.l.b16 %v503
    %v525 = vunpack.c.h.b16 %v503
    %v526 = vunpack.c.l.b16 %v504
    %v527 = vunpack.c.h.b16 %v504
    %v528 = vunpack.c.l.b16 %v505
    %v529 = vunpack.c.h.b16 %v505
    %v530 = vpack.c.b16 %v514, %v514
    %v531 = vpack.c.b16 %v515, %v515
    %v532 = vpack.c.b16 %v516, %v516
    %v533 = vpack.c.b16 %v517, %v517
    %v534 = vpack.c.b16 %v518, %v518
    %v535 = vpack.c.b16 %v519, %v519
    %v536 = vpack.c.b16 %v520, %v520
    %v537 = vpack.c.b16 %v521, %v521
    %v538 = vpack.c.b16 %v522, %v522
    %v539 = vpack.c.b16 %v523, %v523
    %v540 = vpack.c.b16 %v524, %v524
    %v541 = vpack.c.b16 %v525, %v525
    %v542 = vpack.c.b16 %v526, %v526
    %v543 = vpack.c.b16 %v527, %v527
    %v544 = vpack.c.b16 %v528, %v528
    %v545 = vpack.c.b16 %v529, %v529
    %562 = vst [vmem:[%s4] sm:$0xf] %v530
    %563 = vst [vmem:[%s4 + $0x4] sm:$0xf] %v531
    %564 = vst [vmem:[%s4 + $0x8] sm:$0xf] %v532
    %565 = vst [vmem:[%s4 + $0xc] sm:$0xf] %v533
    %566 = vst [vmem:[%s4 + $0x10] sm:$0xf] %v534
    %567 = vst [vmem:[%s4 + $0x14] sm:$0xf] %v535
    %568 = vst [vmem:[%s4 + $0x18] sm:$0xf] %v536
    %569 = vst [vmem:[%s4 + $0x1c] sm:$0xf] %v537
    %570 = vst [vmem:[%s4 + $0x20] sm:$0xf] %v538
    %571 = vst [vmem:[%s4 + $0x24] sm:$0xf] %v539
    %572 = vst [vmem:[%s4 + $0x28] sm:$0xf] %v540
    %573 = vst [vmem:[%s4 + $0x2c] sm:$0xf] %v541
    %574 = vst [vmem:[%s4 + $0x30] sm:$0xf] %v542
    %575 = vst [vmem:[%s4 + $0x34] sm:$0xf] %v543
    %576 = vst [vmem:[%s4 + $0x38] sm:$0xf] %v544
    %577 = vst [vmem:[%s4 + $0x3c] sm:$0xf] %v545
  $region25: #{gcn_2layer.2} parent=0 // pred_fallthru
    _
  // Predicated region
  $region26: #{gcn_2layer.2} parent=0 // pred_check
    _
  $region27: #{gcn_2layer.2} parent=0 // pred_check_branch
    %579 = sbr.rel (0) target = $region29
  $region28: #{gcn_2layer.2} parent=0 // pred_region
    _
  $region29: #{gcn_2layer.2} parent=0 // pred_fallthru
    _
  // Predicated region
  $region30: #{gcn_2layer.2} parent=0 // pred_check
    _
  $region31: #{gcn_2layer.2} parent=0 // pred_check_branch
    %581 = sbr.rel (0) target = $region33
  $region32: #{gcn_2layer.2} parent=0 // pred_region
    _
  $region33: #{gcn_2layer.2} parent=0 // pred_fallthru
    _

</llo_original>
